<compile_context>
chip_gen: v7x
topology: tpu7x:2x2x1
jax: 0.10.0
libtpu: 0.0.40
codegen_flags: <defaults>
</compile_context>

<pallas_src>
import jax
import jax.numpy as jnp
from jax.experimental import pallas as pl
from jax.experimental.pallas import tpu as pltpu


def _round_up(x, m):
    return (x + m - 1) // m * m


# --------------------------------------------------------------------------
# Pass 1: conv-as-matmul (bf16 operands, f32 MXU accumulate).  Writes the conv
# result in bf16 plus per-tile per-channel partial sum / sum-of-squares
# (computed from the f32 accumulator) for the batchnorm batch statistics.
# No bias, no row mask: zero-padded rows contribute exactly 0 to both stats.
# --------------------------------------------------------------------------
def conv_stats_kernel(x_ref, w_ref, y_ref, stats_ref):
    # x_ref: (tm, K) bf16, w_ref: (K, tn) bf16 -> z: (tm, tn) f32
    z = jnp.dot(x_ref[...], w_ref[...], preferred_element_type=jnp.float32)
    y_ref[...] = z.astype(y_ref.dtype)                      # bf16 intermediate
    # Two direct row stores (stats block is (2, tn)): row 0 = sum, row 1 = sum of sq.
    stats_ref[0:1, :] = jnp.sum(z, axis=0, keepdims=True)
    stats_ref[1:2, :] = jnp.sum(z * z, axis=0, keepdims=True)


# --------------------------------------------------------------------------
# Pass 2: fused batchnorm affine (precomputed scale/shift) + ReLU, writing the
# transposed (tn, tm2) tile so the output slab is already channel-major (NCHW).
# --------------------------------------------------------------------------
def bn_relu_kernel(y_ref, scale_ref, shift_ref, o_ref):
    y = y_ref[...].astype(jnp.float32)                       # bf16 -> f32
    o = jnp.maximum(y * scale_ref[...] + shift_ref[...], 0.0)
    o_ref[...] = o.T                                          # XLU transpose -> (tn, tm2)


# --------------------------------------------------------------------------
# Wrapper
# --------------------------------------------------------------------------
def conv_block_forward(x_nchw, weight, bias, gamma, beta,
                       *, stride=1, padding=1, eps=1e-5, tm_pref=512):
    """x_nchw: (N, Cin, H, W); weight: (Cout, Cin, KH, KW). Returns NCHW."""
    N, Cin, H, W = x_nchw.shape
    Cout, _, KH, KW = weight.shape

    Hout = (H + 2 * padding - KH) // stride + 1
    Wout = (W + 2 * padding - KW) // stride + 1
    HW = Hout * Wout
    M = N * HW
    K = Cin * KH * KW                       # exact contraction length (NOT padded)

    # Lane-dense output channels; 256-wide result tiles when Cout allows (v6e/v7x
    # 2x256^2 MXU), otherwise 128 (matches v5e's 4x128^2).
    Cp = _round_up(Cout, 128)
    tn = 256 if Cp % 256 == 0 else 128
    n_c = Cp // tn

    # Per-image row tiling.  Single tile -> round to 16 (bf16 sublanes, full-dim
    # block); multiple tiles -> round to 128 so the transposed pass-2 output block
    # (tn, tm2) keeps a lane-dense last dim.
    if HW <= tm_pref:
        n_hw = 1
        tm = _round_up(HW, 16)
    else:
        n_hw = -(-HW // tm_pref)
        tm = _round_up(-(-HW // n_hw), 128)
    HWp = n_hw * tm

    # --- im2col (plain JAX glue) in bf16, per image: (N, HWp, K) ---
    xp = jnp.pad(x_nchw, ((0, 0), (0, 0), (padding, padding),
                          (padding, padding))).astype(jnp.bfloat16)
    patches = []
    for kh in range(KH):
        for kw in range(KW):
            patches.append(xp[:, :, kh:kh + stride * Hout:stride,
                               kw:kw + stride * Wout:stride])
    # (KH*KW, N, Cin, Hout, Wout) -> (N, Hout, Wout, Cin, KH*KW) -> (N, HW, K)
    p = jnp.stack(patches, axis=0).transpose(1, 3, 4, 2, 0)
    x_col = p.reshape(N, HW, K)                       # K index = ci*KH*KW + kh*KW + kw
    x_col = jnp.pad(x_col, ((0, 0), (0, HWp - HW), (0, 0)))   # zero rows -> zero stats

    w_mat = weight.reshape(Cout, K).T                 # (K, Cout), same K ordering
    w_mat = jnp.pad(w_mat, ((0, 0), (0, Cp - Cout))).astype(jnp.bfloat16)

    # ---------------- Pass 1: conv matmul + per-tile channel stats ----------------
    y_arr, stats = pl.pallas_call(
        conv_stats_kernel,
        out_shape=(
            jax.ShapeDtypeStruct((N, HWp, Cp), jnp.bfloat16),        # bf16 intermediate
            jax.ShapeDtypeStruct((N, n_hw, n_c, 2, tn), jnp.float32),
        ),
        grid_spec=pltpu.PrefetchScalarGridSpec(
            num_scalar_prefetch=0,
            grid=(N, n_hw, n_c),
            in_specs=[
                pl.BlockSpec((None, tm, K), lambda n, i, j: (n, i, 0)),
                pl.BlockSpec((K, tn), lambda n, i, j: (0, j)),
            ],
            out_specs=[
                pl.BlockSpec((None, tm, tn), lambda n, i, j: (n, i, j)),
                pl.BlockSpec((None, None, None, 2, tn),
                             lambda n, i, j: (n, i, j, 0, 0)),
            ],
        ),
        compiler_params=pltpu.CompilerParams(
            dimension_semantics=("parallel", "parallel", "parallel"),
            vmem_limit_bytes=32 * 1024 * 1024,
        ),
    )(x_col, w_mat)

    # ---- tiny per-channel reduction + BN scale/shift in plain JAX ----
    ch_sum = stats[:, :, :, 0, :].sum(axis=(0, 1)).reshape(Cp)
    ch_sq = stats[:, :, :, 1, :].sum(axis=(0, 1)).reshape(Cp)

    gamma_p = jnp.pad(gamma.astype(jnp.float32), (0, Cp - Cout))
    beta_p = jnp.pad(beta.astype(jnp.float32), (0, Cp - Cout))

    mean_z = ch_sum / M                                       # mean of the bias-free conv
    var = jnp.maximum(ch_sq / M - mean_z * mean_z, 0.0)       # biased batch var, clamped
    inv = jax.lax.rsqrt(var + eps)
    scale = (gamma_p * inv).reshape(1, Cp)
    # Conv bias folded out: (z + b) - mean(z + b) == z - mean(z) exactly, so the
    # bias never needs to touch the kernels (variance is also unchanged by it).
    del bias
    shift = (beta_p - mean_z * gamma_p * inv).reshape(1, Cp)

    # ---------------- Pass 2: fused scale/shift + ReLU + layout ----------------
    # Pure HBM roofline -> use a bigger row tile than pass 1 where it divides HWp.
    tm2 = tm
    while tm2 * 2 <= 2048 and HWp % (tm2 * 2) == 0:
        tm2 *= 2
    n_hw2 = HWp // tm2

    o_arr = pl.pallas_call(
        bn_relu_kernel,
        out_shape=jax.ShapeDtypeStruct((N, Cp, HWp), jnp.float32),
        grid_spec=pltpu.PrefetchScalarGridSpec(
            num_scalar_prefetch=0,
            grid=(N, n_hw2, n_c),
            in_specs=[
                pl.BlockSpec((None, tm2, tn), lambda n, i, j: (n, i, j)),
                pl.BlockSpec((1, tn), lambda n, i, j: (0, j)),
                pl.BlockSpec((1, tn), lambda n, i, j: (0, j)),
            ],
            out_specs=pl.BlockSpec((None, tn, tm2), lambda n, i, j: (n, j, i)),
        ),
        compiler_params=pltpu.CompilerParams(
            dimension_semantics=("parallel", "parallel", "parallel"),
            vmem_limit_bytes=32 * 1024 * 1024,
        ),
    )(y_arr, scale, shift)

    # Final NCHW result is a pure slice + reshape (no XLA transpose).
    out = o_arr[:, :Cout, :HW].reshape(N, Cout, Hout, Wout)
    return out


# --------------------------------------------------------------------------
# Pure-JAX reference (f32), mirrors PyTorch train-mode conv_block.
# --------------------------------------------------------------------------
def conv_block_ref(x, weight, bias, gamma, beta, *, stride=1, padding=1, eps=1e-5):
    y = jax.lax.conv_general_dilated(
        x, weight, window_strides=(stride, stride),
        padding=[(padding, padding), (padding, padding)],
        dimension_numbers=("NCHW", "OIHW", "NCHW"))
    y = y + bias.reshape(1, -1, 1, 1)
    mean = y.mean(axis=(0, 2, 3), keepdims=True)
    var = ((y - mean) ** 2).mean(axis=(0, 2, 3), keepdims=True)  # biased
    yhat = (y - mean) * jax.lax.rsqrt(var + eps)
    yhat = yhat * gamma.reshape(1, -1, 1, 1) + beta.reshape(1, -1, 1, 1)
    return jnp.maximum(yhat, 0.0)


if __name__ == "__main__":
    key = jax.random.PRNGKey(0)
    N, Cin, H, W = 2, 4, 16, 16
    Cout, KH, KW = 8, 3, 3

    k1, k2, k3, k4, k5 = jax.random.split(key, 5)
    x = jax.random.normal(k1, (N, Cin, H, W), jnp.float32)
    weight = jax.random.normal(k2, (Cout, Cin, KH, KW), jnp.float32) * 0.1
    bias = jax.random.normal(k3, (Cout,), jnp.float32) * 0.1
    gamma = 1.0 + 0.1 * jax.random.normal(k4, (Cout,), jnp.float32)
    beta = 0.1 * jax.random.normal(k5, (Cout,), jnp.float32)

    out = conv_block_forward(x, weight, bias, gamma, beta, stride=1, padding=1)
    out = jax.block_until_ready(out)

    ref = conv_block_ref(x, weight, bias, gamma, beta, stride=1, padding=1)
    assert out.shape == ref.shape == (N, Cout, H, W)
    # bf16 MXU operands + bf16 intermediate -> compare against the f32 reference with
    # a bf16-level tolerance.
    assert jnp.allclose(out, ref, atol=5e-2, rtol=5e-2)

    print("KERNEL_OK")
</pallas_src>

<mosaic_0001>
module attributes {stable_mosaic.version = 11 : i64} {
  func.func @conv_stats_kernel(%arg0: i32, %arg1: i32, %arg2: i32, %arg3: memref<1x256x36xbf16, #tpu.memory_space<vmem>>, %arg4: memref<36x128xbf16, #tpu.memory_space<vmem>>, %arg5: memref<1x256x128xbf16, #tpu.memory_space<vmem>>, %arg6: memref<1x1x1x2x128xf32, #tpu.memory_space<vmem>>) attributes {dimension_semantics = [#tpu.dimension_semantics<parallel>, #tpu.dimension_semantics<parallel>, #tpu.dimension_semantics<parallel>], iteration_bounds = array<i64: 2, 1, 1>, scalar_prefetch = 0 : i64, scratch_operands = 0 : i64, tpu.core_type = #tpu.core_type<tc>, window_params = [{transform_indices = @transform_0, window_bounds = array<i64: 1, 256, 36>}, {transform_indices = @transform_1, window_bounds = array<i64: 36, 128>}, {transform_indices = @transform_2, window_bounds = array<i64: 1, 256, 128>}, {transform_indices = @transform_3, window_bounds = array<i64: 1, 1, 1, 2, 128>}]} {
    %c0 = arith.constant 0 : index
    %c0_0 = arith.constant 0 : index
    %c0_1 = arith.constant 0 : index
    %0 = vector.load %arg3[%c0, %c0_0, %c0_1] : memref<1x256x36xbf16, #tpu.memory_space<vmem>>, vector<1x256x36xbf16>
    %1 = vector.shape_cast %0 : vector<1x256x36xbf16> to vector<256x36xbf16>
    %c0_2 = arith.constant 0 : index
    %c0_3 = arith.constant 0 : index
    %2 = vector.load %arg4[%c0_2, %c0_3] : memref<36x128xbf16, #tpu.memory_space<vmem>>, vector<36x128xbf16>
    %cst = arith.constant dense<0.000000e+00> : vector<256x128xf32>
    %3 = tpu.matmul %1, %2, %cst {dimension_numbers = #tpu.dot_dimension_numbers<[1], [0], [0], [1], [0, 0, 1, 1], [], []>} : vector<256x36xbf16>, vector<36x128xbf16>, vector<256x128xf32> -> vector<256x128xf32>
    %4 = arith.truncf %3 : vector<256x128xf32> to vector<256x128xbf16>
    %c0_4 = arith.constant 0 : index
    %c0_5 = arith.constant 0 : index
    %c0_6 = arith.constant 0 : index
    %5 = vector.load %arg5[%c0_4, %c0_5, %c0_6] : memref<1x256x128xbf16, #tpu.memory_space<vmem>>, vector<1x256x128xbf16>
    %6 = vector.shape_cast %5 : vector<1x256x128xbf16> to vector<256x128xbf16>
    %7 = vector.shape_cast %4 : vector<256x128xbf16> to vector<1x256x128xbf16>
    tpu.vector_store %arg5[%c0_4, %c0_5, %c0_6], %7 {strides = array<i32>} : memref<1x256x128xbf16, #tpu.memory_space<vmem>>, vector<1x256x128xbf16>,
    %cst_7 = arith.constant dense<0.000000e+00> : vector<128xf32>
    %8 = vector.multi_reduction <add>, %3, %cst_7 [0] : vector<256x128xf32> to vector<128xf32>
    %9 = vector.shape_cast %8 : vector<128xf32> to vector<1x128xf32>
    %c0_8 = arith.constant 0 : index
    %c0_9 = arith.constant 0 : index
    %c0_10 = arith.constant 0 : index
    %c0_11 = arith.constant 0 : index
    %c0_12 = arith.constant 0 : index
    %10 = vector.load %arg6[%c0_8, %c0_9, %c0_10, %c0_11, %c0_12] : memref<1x1x1x2x128xf32, #tpu.memory_space<vmem>>, vector<1x1x1x1x128xf32>
    %11 = vector.shape_cast %10 : vector<1x1x1x1x128xf32> to vector<1x128xf32>
    %12 = vector.shape_cast %9 : vector<1x128xf32> to vector<1x1x1x1x128xf32>
    tpu.vector_store %arg6[%c0_8, %c0_9, %c0_10, %c0_11, %c0_12], %12 {strides = array<i32>} : memref<1x1x1x2x128xf32, #tpu.memory_space<vmem>>, vector<1x1x1x1x128xf32>,
    %13 = arith.mulf %3, %3 : vector<256x128xf32>
    %cst_13 = arith.constant dense<0.000000e+00> : vector<128xf32>
    %14 = vector.multi_reduction <add>, %13, %cst_13 [0] : vector<256x128xf32> to vector<128xf32>
    %15 = vector.shape_cast %14 : vector<128xf32> to vector<1x128xf32>
    %c0_14 = arith.constant 0 : index
    %c0_15 = arith.constant 0 : index
    %c0_16 = arith.constant 0 : index
    %c1 = arith.constant 1 : index
    %c0_17 = arith.constant 0 : index
    %16 = vector.load %arg6[%c0_14, %c0_15, %c0_16, %c1, %c0_17] : memref<1x1x1x2x128xf32, #tpu.memory_space<vmem>>, vector<1x1x1x1x128xf32>
    %17 = vector.shape_cast %16 : vector<1x1x1x1x128xf32> to vector<1x128xf32>
    %18 = vector.shape_cast %15 : vector<1x128xf32> to vector<1x1x1x1x128xf32>
    tpu.vector_store %arg6[%c0_14, %c0_15, %c0_16, %c1, %c0_17], %18 {strides = array<i32>} : memref<1x1x1x2x128xf32, #tpu.memory_space<vmem>>, vector<1x1x1x1x128xf32>,
    return
  }
  func.func @transform_0(%arg0: i32, %arg1: i32, %arg2: i32) -> (i32, i32, i32) {
    %c0_i32 = arith.constant 0 : i32
    %c0_i32_0 = arith.constant 0 : i32
    return %arg0, %arg1, %c0_i32 : i32, i32, i32
  }
  func.func @transform_1(%arg0: i32, %arg1: i32, %arg2: i32) -> (i32, i32) {
    %c0_i32 = arith.constant 0 : i32
    %c0_i32_0 = arith.constant 0 : i32
    return %c0_i32, %arg2 : i32, i32
  }
  func.func @transform_2(%arg0: i32, %arg1: i32, %arg2: i32) -> (i32, i32, i32) {
    %c0_i32 = arith.constant 0 : i32
    return %arg0, %arg1, %arg2 : i32, i32, i32
  }
  func.func @transform_3(%arg0: i32, %arg1: i32, %arg2: i32) -> (i32, i32, i32, i32, i32) {
    %c0_i32 = arith.constant 0 : i32
    %c0_i32_0 = arith.constant 0 : i32
    %c0_i32_1 = arith.constant 0 : i32
    return %arg0, %arg1, %arg2, %c0_i32, %c0_i32_0 : i32, i32, i32, i32, i32
  }
}

</mosaic_0001>

<llo_original>
// kernel: tpu_custom_call.1
$region0: #{tpu_custom_call.1}
  #allocation0 [shape = 'u32[]', space=smem, size = 0x4, offset = 0x4, fixed_abs, tag = 'smem constant byte address 0x4 - core index']
  #allocation1 [shape = 'u32[144,128]{1,0:T(1,128)}', space=vmem, size = 0x12000, scoped, tag = 'internal scratch']
  %s0 = inlined_call_operand.vmem [shape: bf16[2,256,36], index: 0, kind: input, shape index: {}]
  %s1 = inlined_call_operand.vmem [shape: bf16[36,128], index: 1, kind: input, shape index: {}]
  %s2 = inlined_call_operand.hbm [shape: bf16[2,256,128], index: 2, kind: output, shape index: {0}]
  %s3 = inlined_call_operand.hbm [shape: f32[2,1,1,2,128], index: 3, kind: output, shape index: {1}]
  %4 = xla_tuple %s2, %s3
  %s5 = sld [smem:[#allocation0]]
  $region49: #{tpu_custom_call.1} parent=0
    _
  %s7 = ssub.s32 1, %s5
  %s8 = scalar_select 0, %s7, %s5
  $region1: #{tpu_custom_call.1} parent=0
    #allocation2 [shape = 'u8[131072]{0}', space=vmem, size = 0x20000, scoped, tag = 'output window, operand 0']
    #allocation3 [shape = 's32[2]{0}', space=sflag, size = 0x8, scoped, tag = 'scoped memory for tpu_custom_call.1']
    #allocation4 [shape = 'u8[2048]{0}', space=vmem, size = 0x800, scoped, tag = 'output window, operand 1']
    #allocation5 [shape = 's32[2]{0}', space=sflag, size = 0x8, scoped, tag = 'scoped memory for tpu_custom_call.1']
    %9 = vsyncpa [#allocation3], 0
    %s10 = scalar_lea.sflag [#allocation3], 1
    %11 = vsyncpa %s10, 0
    %12 = vsyncpa [#allocation5], 0
    %s13 = scalar_lea.sflag [#allocation5], 1
    %14 = vsyncpa %s13, 0
    loop: start=0, step=1, limit=4
    $region2: #{tpu_custom_call.1} parent=1 // loop_pre_header
      _
    $region3: #{tpu_custom_call.1} parent=1 // loop_header
      %s16 = sphi 0, %s20
      %p17 = scmp.ge.s32.totalorder %s16, 4
      %s23 = sphi 0, %s42
      %s24 = sphi 0, %s38
      %s25 = sphi 0, %s34
      %s26 = sphi 0, %s23
      %s27 = sphi 0, %s24
      %s28 = sphi 0, %s25
      %s29 = sphi 0, %s26
      %s30 = sphi 0, %s27
      %s31 = sphi 0, %s28
      %s47 = sphi 0, %s49
      %s50 = sphi 0, %s47
      %s51 = sphi 0, %s50
      %s67 = sphi 0, %s51
      %s73 = sphi 0, %s75
      %s76 = sphi 0, %s73
      %s77 = sphi 0, %s76
      %s93 = sphi 0, %s77
      %s103 = sphi 0, %s105
      %s106 = sphi 0, %s103
      %s107 = sphi 0, %s106
      %s123 = sphi 0, %s107
      %s133 = sphi 0, %s135
      %s136 = sphi 0, %s133
      %s137 = sphi 0, %s136
      %s153 = sphi 0, %s137
    $region4: #{tpu_custom_call.1} parent=1 // loop_header_branch
      %19 = sbr.rel (%p17) target = $region8
    $region5: #{tpu_custom_call.1} parent=1 // loop_body
      %s21 = ssub.s32 %s16, 1
      %s22 = ssub.s32 %s16, 2
      %s32 = sadd.s32 1, %s25
      %p33 = scmp.ge.s32.totalorder %s32, 1
      %s34 = scalar_select %p33, 0, %s32
      %s35 = sadd.s32 1, %s24
      %s36 = scalar_select %p33, %s35, %s24
      %p37 = scmp.ge.s32.totalorder %s36, 1
      %s38 = scalar_select %p37, 0, %s36
      %s39 = sadd.s32 1, %s23
      %s40 = scalar_select %p37, %s39, %s23
      %p41 = scmp.ge.s32.totalorder %s40, 2
      %s42 = scalar_select %p41, 0, %s40
      %s43 = ssub.s32 %s23, %s42
      %s44 = ssub.s32 %s24, %s38
      %s45 = sor.u32 %s43, %s44
      %p46 = scmp.eq.s32.totalorder %s45, 0
      %s48 = sadd.s32 %s47, 1
      %s49 = scalar_select %p46, %s47, %s48
      %p52 = pneg %p46
      %p53 = scmp.eq.s32.totalorder %s16, 1
      %p54 = por %p52, %p53
      %p55 = scmp.ne.s32.totalorder %s47, %s50
      %p56 = scmp.eq.s32.totalorder %s16, 0
      %p57 = por %p55, %p56
      %p58 = scmp.ne.s32.totalorder %s47, %s50
      %p59 = scmp.eq.s32.totalorder %s21, 1
      %p60 = por %p58, %p59
      %p61 = scmp.ne.s32.totalorder %s50, %s51
      %p62 = scmp.eq.s32.totalorder %s21, 0
      %p63 = por %p61, %p62
      %p64 = scmp.ne.s32.totalorder %s50, %s51
      %p65 = scmp.eq.s32.totalorder %s22, 1
      %p66 = por %p64, %p65
      %p68 = scmp.ne.s32.totalorder %s51, %s67
      %p69 = scmp.eq.s32.totalorder %s22, 0
      %p70 = por %p68, %p69
      %s71 = ssub.s32 %s25, %s34
      %p72 = scmp.eq.s32.totalorder %s71, 0
      %s74 = sadd.s32 %s73, 1
      %s75 = scalar_select %p72, %s73, %s74
      %p78 = pneg %p72
      %p79 = scmp.eq.s32.totalorder %s16, 1
      %p80 = por %p78, %p79
      %p81 = scmp.ne.s32.totalorder %s73, %s76
      %p82 = scmp.eq.s32.totalorder %s16, 0
      %p83 = por %p81, %p82
      %p84 = scmp.ne.s32.totalorder %s73, %s76
      %p85 = scmp.eq.s32.totalorder %s21, 1
      %p86 = por %p84, %p85
      %p87 = scmp.ne.s32.totalorder %s76, %s77
      %p88 = scmp.eq.s32.totalorder %s21, 0
      %p89 = por %p87, %p88
      %p90 = scmp.ne.s32.totalorder %s76, %s77
      %p91 = scmp.eq.s32.totalorder %s22, 1
      %p92 = por %p90, %p91
      %p94 = scmp.ne.s32.totalorder %s77, %s93
      %p95 = scmp.eq.s32.totalorder %s22, 0
      %p96 = por %p94, %p95
      %s97 = ssub.s32 %s23, %s42
      %s98 = ssub.s32 %s24, %s38
      %s99 = sor.u32 %s97, %s98
      %s100 = ssub.s32 %s25, %s34
      %s101 = sor.u32 %s99, %s100
      %p102 = scmp.eq.s32.totalorder %s101, 0
      %s104 = sadd.s32 %s103, 1
      %s105 = scalar_select %p102, %s103, %s104
      %p108 = pneg %p102
      %p109 = scmp.eq.s32.totalorder %s16, 1
      %p110 = por %p108, %p109
      %p111 = scmp.ne.s32.totalorder %s103, %s106
      %p112 = scmp.eq.s32.totalorder %s16, 0
      %p113 = por %p111, %p112
      %p114 = scmp.ne.s32.totalorder %s103, %s106
      %p115 = scmp.eq.s32.totalorder %s21, 1
      %p116 = por %p114, %p115
      %p117 = scmp.ne.s32.totalorder %s106, %s107
      %p118 = scmp.eq.s32.totalorder %s21, 0
      %p119 = por %p117, %p118
      %p120 = scmp.ne.s32.totalorder %s106, %s107
      %p121 = scmp.eq.s32.totalorder %s22, 1
      %p122 = por %p120, %p121
      %p124 = scmp.ne.s32.totalorder %s107, %s123
      %p125 = scmp.eq.s32.totalorder %s22, 0
      %p126 = por %p124, %p125
      %s127 = ssub.s32 %s23, %s42
      %s128 = ssub.s32 %s24, %s38
      %s129 = sor.u32 %s127, %s128
      %s130 = ssub.s32 %s25, %s34
      %s131 = sor.u32 %s129, %s130
      %p132 = scmp.eq.s32.totalorder %s131, 0
      %s134 = sadd.s32 %s133, 1
      %s135 = scalar_select %p132, %s133, %s134
      %p138 = pneg %p132
      %p139 = scmp.eq.s32.totalorder %s16, 1
      %p140 = por %p138, %p139
      %p141 = scmp.ne.s32.totalorder %s133, %s136
      %p142 = scmp.eq.s32.totalorder %s16, 0
      %p143 = por %p141, %p142
      %p144 = scmp.ne.s32.totalorder %s133, %s136
      %p145 = scmp.eq.s32.totalorder %s21, 1
      %p146 = por %p144, %p145
      %p147 = scmp.ne.s32.totalorder %s136, %s137
      %p148 = scmp.eq.s32.totalorder %s21, 0
      %p149 = por %p147, %p148
      %p150 = scmp.ne.s32.totalorder %s136, %s137
      %p151 = scmp.eq.s32.totalorder %s22, 1
      %p152 = por %p150, %p151
      %p154 = scmp.ne.s32.totalorder %s137, %s153
      %p155 = scmp.eq.s32.totalorder %s22, 0
      %p156 = por %p154, %p155
      %p157 = scmp.le.s32.totalorder 1, %s16
      %p158 = scmp.lt.s32.totalorder %s16, 3
      %p159 = pnand %p157, %p158
      %p160 = pneg %p159
      // Predicated region
      $region9: #{tpu_custom_call.1} parent=5 // pred_check
        _
      $region10: #{tpu_custom_call.1} parent=5 // pred_check_branch
        %162 = sbr.rel (%p159) target = $region12
      $region11: #{tpu_custom_call.1} parent=5 // pred_region
        %s163 = ssub.s32 %s16, 1
        // Predicated region
        $region13: #{tpu_custom_call.1} parent=11 // pred_check
          %p164 = pneg %p89
        $region14: #{tpu_custom_call.1} parent=11 // pred_check_branch
          %166 = sbr.rel (%p164) target = $region16
        $region15: #{tpu_custom_call.1} parent=11 // pred_region
          %p167 = scmp.lt.s32.totalorder %s28, 0
          %s168 = scalar_select %p167, %s28, 0
          %s169 = smul.addr %s168, 4
          %s170 = scalar_lea.vmem %s1, %s169
        $region16: #{tpu_custom_call.1} parent=11 // pred_fallthru
          _
      $region12: #{tpu_custom_call.1} parent=5 // pred_fallthru
        _
      %p171 = scmp.lt.s32.totalorder %s16, 2
      // Predicated region
      $region17: #{tpu_custom_call.1} parent=5 // pred_check
        %p172 = pneg %p171
      $region18: #{tpu_custom_call.1} parent=5 // pred_check_branch
        %174 = sbr.rel (%p172) target = $region20
      $region19: #{tpu_custom_call.1} parent=5 // pred_region
        // Predicated region
        $region21: #{tpu_custom_call.1} parent=19 // pred_check
          %p175 = pneg %p57
        $region22: #{tpu_custom_call.1} parent=19 // pred_check_branch
          %177 = sbr.rel (%p175) target = $region24
        $region23: #{tpu_custom_call.1} parent=19 // pred_region
          %s178 = smul.u32 32, %s24
          %p179 = scmp.lt.s32.totalorder %s23, 1
          %s180 = scalar_select %p179, %s23, 1
          %p181 = scmp.lt.s32.totalorder %s178, 31
          %s182 = scalar_select %p181, %s178, 31
          %s183 = smul.addr %s180, 32
          %s184 = sadd.s32 %s182, %s183
          %s185 = smul.addr %s184, 4
          %s186 = scalar_lea.vmem %s0, %s185
          %s187 = smul.u32 32, %s24
        $region24: #{tpu_custom_call.1} parent=19 // pred_fallthru
          _
      $region20: #{tpu_custom_call.1} parent=5 // pred_fallthru
        _
      %p188 = scmp.le.s32.totalorder 1, %s16
      %p189 = scmp.lt.s32.totalorder %s16, 3
      %p190 = pnand %p188, %p189
      %p191 = pneg %p190
      // Predicated region
      $region25: #{tpu_custom_call.1} parent=5 // pred_check
        _
      $region26: #{tpu_custom_call.1} parent=5 // pred_check_branch
        %193 = sbr.rel (%p190) target = $region28
      $region27: #{tpu_custom_call.1} parent=5 // pred_region
        %s194 = ssub.s32 %s16, 1
        %s195 = smul.u32 32, %s27
        %p196 = scmp.lt.s32.totalorder %s26, 1
        %s197 = scalar_select %p196, %s26, 1
        %p198 = scmp.lt.s32.totalorder %s195, 31
        %s199 = scalar_select %p198, %s195, 31
        %s200 = smul.addr %s197, 32
        %s201 = sadd.s32 %s199, %s200
        %s202 = smul.addr %s201, 4
        %s203 = scalar_lea.vmem %s0, %s202
        %p204 = pneg %p63
        %p205 = pneg %p60
        %p206 = scmp.lt.s32.totalorder %s28, 0
        %s207 = scalar_select %p206, %s28, 0
        %s208 = smul.addr %s207, 4
        %s209 = scalar_lea.vmem %s1, %s208
        %p210 = pneg %p89
        %p211 = pneg %p86
        %p212 = pneg %p119
        %p213 = pneg %p116
        %s214 = sand.u32 %s106, 1
        %s215 = scalar_lea.sflag [#allocation3], %s214
        %s216 = sand.u32 %s106, 1
        %s217 = smul.addr %s216, 128
        %s218 = scalar_lea.vmem [#allocation2], %s217
        %p219 = pneg %p149
        %p220 = pneg %p146
        %s221 = sand.u32 %s136, 1
        %s222 = scalar_lea.sflag [#allocation5], %s221
        %s223 = sand.u32 %s136, 1
        %s224 = smul.addr %s223, 2
        %s225 = scalar_lea.vmem [#allocation4], %s224
        %s226 = smul.u32 32, %s27
        %p227 = scmp.lt.s32.totalorder %s26, 1
        %s228 = scalar_select %p227, %s26, 1
        %p229 = scmp.lt.s32.totalorder %s226, 31
        %s230 = scalar_select %p229, %s226, 31
        %s231 = smul.addr %s228, 32
        %s232 = sadd.s32 %s230, %s231
        %s233 = smul.addr %s232, 4
        %s234 = scalar_lea.vmem %s0, %s233
        %s235 = smul.u32 32, %s27
        %p236 = scmp.lt.s32.totalorder %s28, 0
        %s237 = scalar_select %p236, %s28, 0
        %s238 = smul.addr %s237, 4
        %s239 = scalar_lea.vmem %s1, %s238
        %s240 = smul.u32 32, %s27
        %v242 = vld [vmem:[%s234] sm:$0xf]
        %v243 = vld [vmem:[%s234 + $0x4] sm:$0xf]
        %v244 = vld [vmem:[%s234 + $0x8] sm:$0xf]
        %v245 = vld [vmem:[%s234 + $0xc] sm:$0xf]
        %v246 = vld [vmem:[%s234 + $0x10] sm:$0xf]
        %v247 = vld [vmem:[%s234 + $0x14] sm:$0xf]
        %v248 = vld [vmem:[%s234 + $0x18] sm:$0xf]
        %v249 = vld [vmem:[%s234 + $0x1c] sm:$0xf]
        %v250 = vld [vmem:[%s234 + $0x20] sm:$0xf]
        %v251 = vld [vmem:[%s234 + $0x24] sm:$0xf]
        %v252 = vld [vmem:[%s234 + $0x28] sm:$0xf]
        %v253 = vld [vmem:[%s234 + $0x2c] sm:$0xf]
        %v254 = vld [vmem:[%s234 + $0x30] sm:$0xf]
        %v255 = vld [vmem:[%s234 + $0x34] sm:$0xf]
        %v256 = vld [vmem:[%s234 + $0x38] sm:$0xf]
        %v257 = vld [vmem:[%s234 + $0x3c] sm:$0xf]
        %v258 = vld [vmem:[%s234 + $0x40] sm:$0xf]
        %v259 = vld [vmem:[%s234 + $0x44] sm:$0xf]
        %v260 = vld [vmem:[%s234 + $0x48] sm:$0xf]
        %v261 = vld [vmem:[%s234 + $0x4c] sm:$0xf]
        %v262 = vld [vmem:[%s234 + $0x50] sm:$0xf]
        %v263 = vld [vmem:[%s234 + $0x54] sm:$0xf]
        %v264 = vld [vmem:[%s234 + $0x58] sm:$0xf]
        %v265 = vld [vmem:[%s234 + $0x5c] sm:$0xf]
        %v266 = vld [vmem:[%s234 + $0x60] sm:$0xf]
        %v267 = vld [vmem:[%s234 + $0x64] sm:$0xf]
        %v268 = vld [vmem:[%s234 + $0x68] sm:$0xf]
        %v269 = vld [vmem:[%s234 + $0x6c] sm:$0xf]
        %v270 = vld [vmem:[%s234 + $0x70] sm:$0xf]
        %v271 = vld [vmem:[%s234 + $0x74] sm:$0xf]
        %v272 = vld [vmem:[%s234 + $0x78] sm:$0xf]
        %v273 = vld [vmem:[%s234 + $0x7c] sm:$0xf]
        %v274 = vld [vmem:[%s239] sm:$0xf]
        %v275 = vld [vmem:[%s239 + $0x4] sm:$0xf]
        %v276 = vld [vmem:[%s239 + $0x8] sm:$0xf]
        %v277 = vld [vmem:[%s239 + $0xc] sm:$0xf]
        %v278 = vld [vmem:[%s239 + $0x10] sm:$0x3]
        %v311 = vunpack.c.l.b16 %v242
        %v312 = vunpack.c.l.b16 %v243
        %v313 = vunpack.c.l.b16 %v244
        %v314 = vunpack.c.l.b16 %v245
        %v315 = vunpack.c.l.b16 %v246
        %v316 = vunpack.c.l.b16 %v247
        %v317 = vunpack.c.l.b16 %v248
        %v318 = vunpack.c.l.b16 %v249
        %v319 = vunpack.c.l.b16 %v250
        %v320 = vunpack.c.l.b16 %v251
        %v321 = vunpack.c.l.b16 %v252
        %v322 = vunpack.c.l.b16 %v253
        %v323 = vunpack.c.l.b16 %v254
        %v324 = vunpack.c.l.b16 %v255
        %v325 = vunpack.c.l.b16 %v256
        %v326 = vunpack.c.l.b16 %v257
        %v327 = vunpack.c.l.b16 %v258
        %v328 = vunpack.c.l.b16 %v259
        %v329 = vunpack.c.l.b16 %v260
        %v330 = vunpack.c.l.b16 %v261
        %v331 = vunpack.c.l.b16 %v262
        %v332 = vunpack.c.l.b16 %v263
        %v333 = vunpack.c.l.b16 %v264
        %v334 = vunpack.c.l.b16 %v265
        %v335 = vunpack.c.l.b16 %v266
        %v336 = vunpack.c.l.b16 %v267
        %v337 = vunpack.c.l.b16 %v268
        %v338 = vunpack.c.l.b16 %v269
        %v339 = vunpack.c.l.b16 %v270
        %v340 = vunpack.c.l.b16 %v271
        %v341 = vunpack.c.l.b16 %v272
        %v342 = vunpack.c.l.b16 %v273
        %v343 = vpack.c.b16 %v312, %v311
        %v344 = vpack.c.b16 %v314, %v313
        %v345 = vpack.c.b16 %v316, %v315
        %v346 = vpack.c.b16 %v318, %v317
        %v347 = vpack.c.b16 %v320, %v319
        %v348 = vpack.c.b16 %v322, %v321
        %v349 = vpack.c.b16 %v324, %v323
        %v350 = vpack.c.b16 %v326, %v325
        %v351 = vpack.c.b16 %v328, %v327
        %v352 = vpack.c.b16 %v330, %v329
        %v353 = vpack.c.b16 %v332, %v331
        %v354 = vpack.c.b16 %v334, %v333
        %v355 = vpack.c.b16 %v336, %v335
        %v356 = vpack.c.b16 %v338, %v337
        %v357 = vpack.c.b16 %v340, %v339
        %v358 = vpack.c.b16 %v342, %v341
        %v364 = vunpack.c.l.b16 %v274
        %v365 = vunpack.c.l.b16 %v275
        %v366 = vunpack.c.l.b16 %v276
        %v367 = vunpack.c.l.b16 %v277
        %v368 = vunpack.c.l.b16 %v278
        %v369 = vpack.c.b16 %v365, %v364
        %v370 = vpack.c.b16 %v367, %v366
        %v371 = vpack.c.b16 %v368, %v368
        %vm374 = vcmask 293888
        %v376 = vsel %vm374, %v343, 0
        %v379 = vsel %vm374, %v344, 0
        %v382 = vsel %vm374, %v345, 0
        %v385 = vsel %vm374, %v346, 0
        %v388 = vsel %vm374, %v347, 0
        %v391 = vsel %vm374, %v348, 0
        %v394 = vsel %vm374, %v349, 0
        %v397 = vsel %vm374, %v350, 0
        %v400 = vsel %vm374, %v351, 0
        %v403 = vsel %vm374, %v352, 0
        %v406 = vsel %vm374, %v353, 0
        %v409 = vsel %vm374, %v354, 0
        %v412 = vsel %vm374, %v355, 0
        %v415 = vsel %vm374, %v356, 0
        %v418 = vsel %vm374, %v357, 0
        %v421 = vsel %vm374, %v358, 0
        %vm423 = vcmask 1041408
        %v425 = vsel %vm423, %v371, 0
        %427 = vmatprep.subr.bf16.mxu0 0
        %428 = vmatpush1.bf16.msra.mxu0 %v369
        %429 = vmatprep.subr.bf16.mxu0 0
        %430 = vmatpush1.bf16.msra.mxu0 %v370
        %431 = vmatprep.subr.bf16.mxu0 0
        %432 = vmatpush1.bf16.msra.mxu0 %v425
        %433 = vmatprep.subr.bf16.mxu0 0
        %434 = vmatpush1.bf16.msra.mxu0 0
        %435 = vmatprep.subr.bf16.mxu0 0
        %436 = vmatpush1.bf16.msra.mxu0 0
        %437 = vmatprep.subr.bf16.mxu0 0
        %438 = vmatpush1.bf16.msra.mxu0 0
        %439 = vmatprep.subr.bf16.mxu0 0
        %440 = vmatpush1.bf16.msra.mxu0 0
        %441 = vmatprep.subr.bf16.mxu0 0
        %442 = vmatpush1.bf16.msra.mxu0 0
        %443 = vmatprep.subr.bf16.mxu0 0
        %444 = vmatpush1.bf16.msra.mxu0 0
        %445 = vmatprep.subr.bf16.mxu0 0
        %446 = vmatpush1.bf16.msra.mxu0 0
        %447 = vmatprep.subr.bf16.mxu0 0
        %448 = vmatpush1.bf16.msra.mxu0 0
        %449 = vmatprep.subr.bf16.mxu0 0
        %450 = vmatpush1.bf16.msra.mxu0 0
        %451 = vmatprep.subr.bf16.mxu0 0
        %452 = vmatpush1.bf16.msra.mxu0 0
        %453 = vmatprep.subr.bf16.mxu0 0
        %454 = vmatpush1.bf16.msra.mxu0 0
        %455 = vmatprep.subr.bf16.mxu0 0
        %456 = vmatpush1.bf16.msra.mxu0 0
        %457 = vmatprep.subr.bf16.mxu0 0
        %458 = vmatpush1.bf16.msra.mxu0 0
        %459 = vmatprep.mubr.bf16.mxu0 0
        %460 = vmatmul.mubr.bf16.gmra.mrb[0].mxu0 %v376
        %v461 = vpop.f32.mrb[0].mxu0
        %v462 = vadd.f32 0.0, %v461
        %v463 = vpop.f32.mrb[0].mxu0
        %v464 = vpop.f32.mrb[0].mxu0
        %v465 = vadd.f32 0.0, %v464
        %v466 = vpop.f32.mrb[0].mxu0
        %467 = vmatprep.mubr.bf16.mxu0 0
        %468 = vmatmul.mubr.bf16.gmra.mrb[0].mxu0 %v379
        %v469 = vpop.f32.mrb[0].mxu0
        %v470 = vadd.f32 0.0, %v469
        %v471 = vpop.f32.mrb[0].mxu0
        %v472 = vpop.f32.mrb[0].mxu0
        %v473 = vadd.f32 0.0, %v472
        %v474 = vpop.f32.mrb[0].mxu0
        %475 = vmatprep.mubr.bf16.mxu0 0
        %476 = vmatmul.mubr.bf16.gmra.mrb[0].mxu0 %v382
        %v477 = vpop.f32.mrb[0].mxu0
        %v478 = vadd.f32 0.0, %v477
        %v479 = vpop.f32.mrb[0].mxu0
        %v480 = vpop.f32.mrb[0].mxu0
        %v481 = vadd.f32 0.0, %v480
        %v482 = vpop.f32.mrb[0].mxu0
        %483 = vmatprep.mubr.bf16.mxu0 0
        %484 = vmatmul.mubr.bf16.gmra.mrb[0].mxu0 %v385
        %v485 = vpop.f32.mrb[0].mxu0
        %v486 = vadd.f32 0.0, %v485
        %v487 = vpop.f32.mrb[0].mxu0
        %v488 = vpop.f32.mrb[0].mxu0
        %v489 = vadd.f32 0.0, %v488
        %v490 = vpop.f32.mrb[0].mxu0
        %491 = vmatprep.mubr.bf16.mxu0 0
        %492 = vmatmul.mubr.bf16.gmra.mrb[0].mxu0 %v388
        %v493 = vpop.f32.mrb[0].mxu0
        %v494 = vadd.f32 0.0, %v493
        %v495 = vpop.f32.mrb[0].mxu0
        %v496 = vpop.f32.mrb[0].mxu0
        %v497 = vadd.f32 0.0, %v496
        %v498 = vpop.f32.mrb[0].mxu0
        %499 = vmatprep.mubr.bf16.mxu0 0
        %500 = vmatmul.mubr.bf16.gmra.mrb[0].mxu0 %v391
        %v501 = vpop.f32.mrb[0].mxu0
        %v502 = vadd.f32 0.0, %v501
        %v503 = vpop.f32.mrb[0].mxu0
        %v504 = vpop.f32.mrb[0].mxu0
        %v505 = vadd.f32 0.0, %v504
        %v506 = vpop.f32.mrb[0].mxu0
        %507 = vmatprep.mubr.bf16.mxu0 0
        %508 = vmatmul.mubr.bf16.gmra.mrb[0].mxu0 %v394
        %v509 = vpop.f32.mrb[0].mxu0
        %v510 = vadd.f32 0.0, %v509
        %v511 = vpop.f32.mrb[0].mxu0
        %v512 = vpop.f32.mrb[0].mxu0
        %v513 = vadd.f32 0.0, %v512
        %v514 = vpop.f32.mrb[0].mxu0
        %515 = vmatprep.mubr.bf16.mxu0 0
        %516 = vmatmul.mubr.bf16.gmra.mrb[0].mxu0 %v397
        %v517 = vpop.f32.mrb[0].mxu0
        %v518 = vadd.f32 0.0, %v517
        %v519 = vpop.f32.mrb[0].mxu0
        %v520 = vpop.f32.mrb[0].mxu0
        %v521 = vadd.f32 0.0, %v520
        %v522 = vpop.f32.mrb[0].mxu0
        %523 = vmatprep.mubr.bf16.mxu0 0
        %524 = vmatmul.mubr.bf16.gmra.mrb[0].mxu0 %v400
        %v525 = vpop.f32.mrb[0].mxu0
        %v526 = vadd.f32 0.0, %v525
        %v527 = vpop.f32.mrb[0].mxu0
        %v528 = vpop.f32.mrb[0].mxu0
        %v529 = vadd.f32 0.0, %v528
        %v530 = vpop.f32.mrb[0].mxu0
        %531 = vmatprep.mubr.bf16.mxu0 0
        %532 = vmatmul.mubr.bf16.gmra.mrb[0].mxu0 %v403
        %v533 = vpop.f32.mrb[0].mxu0
        %v534 = vadd.f32 0.0, %v533
        %v535 = vpop.f32.mrb[0].mxu0
        %v536 = vpop.f32.mrb[0].mxu0
        %v537 = vadd.f32 0.0, %v536
        %v538 = vpop.f32.mrb[0].mxu0
        %539 = vmatprep.mubr.bf16.mxu0 0
        %540 = vmatmul.mubr.bf16.gmra.mrb[0].mxu0 %v406
        %v541 = vpop.f32.mrb[0].mxu0
        %v542 = vadd.f32 0.0, %v541
        %v543 = vpop.f32.mrb[0].mxu0
        %v544 = vpop.f32.mrb[0].mxu0
        %v545 = vadd.f32 0.0, %v544
        %v546 = vpop.f32.mrb[0].mxu0
        %547 = vmatprep.mubr.bf16.mxu0 0
        %548 = vmatmul.mubr.bf16.gmra.mrb[0].mxu0 %v409
        %v549 = vpop.f32.mrb[0].mxu0
        %v550 = vadd.f32 0.0, %v549
        %v551 = vpop.f32.mrb[0].mxu0
        %v552 = vpop.f32.mrb[0].mxu0
        %v553 = vadd.f32 0.0, %v552
        %v554 = vpop.f32.mrb[0].mxu0
        %555 = vmatprep.mubr.bf16.mxu0 0
        %556 = vmatmul.mubr.bf16.gmra.mrb[0].mxu0 %v412
        %v557 = vpop.f32.mrb[0].mxu0
        %v558 = vadd.f32 0.0, %v557
        %v559 = vpop.f32.mrb[0].mxu0
        %v560 = vpop.f32.mrb[0].mxu0
        %v561 = vadd.f32 0.0, %v560
        %v562 = vpop.f32.mrb[0].mxu0
        %563 = vmatprep.mubr.bf16.mxu0 0
        %564 = vmatmul.mubr.bf16.gmra.mrb[0].mxu0 %v415
        %v565 = vpop.f32.mrb[0].mxu0
        %v566 = vadd.f32 0.0, %v565
        %v567 = vpop.f32.mrb[0].mxu0
        %v568 = vpop.f32.mrb[0].mxu0
        %v569 = vadd.f32 0.0, %v568
        %v570 = vpop.f32.mrb[0].mxu0
        %571 = vmatprep.mubr.bf16.mxu0 0
        %572 = vmatmul.mubr.bf16.gmra.mrb[0].mxu0 %v418
        %v573 = vpop.f32.mrb[0].mxu0
        %v574 = vadd.f32 0.0, %v573
        %v575 = vpop.f32.mrb[0].mxu0
        %v576 = vpop.f32.mrb[0].mxu0
        %v577 = vadd.f32 0.0, %v576
        %v578 = vpop.f32.mrb[0].mxu0
        %579 = vmatprep.mubr.bf16.mxu0 0
        %580 = vmatmul.mubr.bf16.gmra.mrb[0].mxu0 %v421
        %v581 = vpop.f32.mrb[0].mxu0
        %v582 = vadd.f32 0.0, %v581
        %v583 = vpop.f32.mrb[0].mxu0
        %v584 = vpop.f32.mrb[0].mxu0
        %v585 = vadd.f32 0.0, %v584
        %v586 = vpop.f32.mrb[0].mxu0
        %587 = vdwg.mxu0
        %v588 = vpack.c.bf16 %v465, %v462
        %v589 = vpack.c.bf16 %v473, %v470
        %v590 = vpack.c.bf16 %v481, %v478
        %v591 = vpack.c.bf16 %v489, %v486
        %v592 = vpack.c.bf16 %v497, %v494
        %v593 = vpack.c.bf16 %v505, %v502
        %v594 = vpack.c.bf16 %v513, %v510
        %v595 = vpack.c.bf16 %v521, %v518
        %v596 = vpack.c.bf16 %v529, %v526
        %v597 = vpack.c.bf16 %v537, %v534
        %v598 = vpack.c.bf16 %v545, %v542
        %v599 = vpack.c.bf16 %v553, %v550
        %v600 = vpack.c.bf16 %v561, %v558
        %v601 = vpack.c.bf16 %v569, %v566
        %v602 = vpack.c.bf16 %v577, %v574
        %v603 = vpack.c.bf16 %v585, %v582
        %v620 = vunpack.c.l.b16 %v588
        %v621 = vunpack.c.h.b16 %v588
        %v622 = vunpack.c.l.b16 %v589
        %v623 = vunpack.c.h.b16 %v589
        %v624 = vunpack.c.l.b16 %v590
        %v625 = vunpack.c.h.b16 %v590
        %v626 = vunpack.c.l.b16 %v591
        %v627 = vunpack.c.h.b16 %v591
        %v628 = vunpack.c.l.b16 %v592
        %v629 = vunpack.c.h.b16 %v592
        %v630 = vunpack.c.l.b16 %v593
        %v631 = vunpack.c.h.b16 %v593
        %v632 = vunpack.c.l.b16 %v594
        %v633 = vunpack.c.h.b16 %v594
        %v634 = vunpack.c.l.b16 %v595
        %v635 = vunpack.c.h.b16 %v595
        %v636 = vunpack.c.l.b16 %v596
        %v637 = vunpack.c.h.b16 %v596
        %v638 = vunpack.c.l.b16 %v597
        %v639 = vunpack.c.h.b16 %v597
        %v640 = vunpack.c.l.b16 %v598
        %v641 = vunpack.c.h.b16 %v598
        %v642 = vunpack.c.l.b16 %v599
        %v643 = vunpack.c.h.b16 %v599
        %v644 = vunpack.c.l.b16 %v600
        %v645 = vunpack.c.h.b16 %v600
        %v646 = vunpack.c.l.b16 %v601
        %v647 = vunpack.c.h.b16 %v601
        %v648 = vunpack.c.l.b16 %v602
        %v649 = vunpack.c.h.b16 %v602
        %v650 = vunpack.c.l.b16 %v603
        %v651 = vunpack.c.h.b16 %v603
        %v652 = vpack.c.b16 %v620, %v620
        %v653 = vpack.c.b16 %v621, %v621
        %v654 = vpack.c.b16 %v622, %v622
        %v655 = vpack.c.b16 %v623, %v623
        %v656 = vpack.c.b16 %v624, %v624
        %v657 = vpack.c.b16 %v625, %v625
        %v658 = vpack.c.b16 %v626, %v626
        %v659 = vpack.c.b16 %v627, %v627
        %v660 = vpack.c.b16 %v628, %v628
        %v661 = vpack.c.b16 %v629, %v629
        %v662 = vpack.c.b16 %v630, %v630
        %v663 = vpack.c.b16 %v631, %v631
        %v664 = vpack.c.b16 %v632, %v632
        %v665 = vpack.c.b16 %v633, %v633
        %v666 = vpack.c.b16 %v634, %v634
        %v667 = vpack.c.b16 %v635, %v635
        %v668 = vpack.c.b16 %v636, %v636
        %v669 = vpack.c.b16 %v637, %v637
        %v670 = vpack.c.b16 %v638, %v638
        %v671 = vpack.c.b16 %v639, %v639
        %v672 = vpack.c.b16 %v640, %v640
        %v673 = vpack.c.b16 %v641, %v641
        %v674 = vpack.c.b16 %v642, %v642
        %v675 = vpack.c.b16 %v643, %v643
        %v676 = vpack.c.b16 %v644, %v644
        %v677 = vpack.c.b16 %v645, %v645
        %v678 = vpack.c.b16 %v646, %v646
        %v679 = vpack.c.b16 %v647, %v647
        %v680 = vpack.c.b16 %v648, %v648
        %v681 = vpack.c.b16 %v649, %v649
        %v682 = vpack.c.b16 %v650, %v650
        %v683 = vpack.c.b16 %v651, %v651
        %716 = vst [vmem:[%s218] sm:$0xf] %v652
        %717 = vst [vmem:[%s218 + $0x4] sm:$0xf] %v653
        %718 = vst [vmem:[%s218 + $0x8] sm:$0xf] %v654
        %719 = vst [vmem:[%s218 + $0xc] sm:$0xf] %v655
        %720 = vst [vmem:[%s218 + $0x10] sm:$0xf] %v656
        %721 = vst [vmem:[%s218 + $0x14] sm:$0xf] %v657
        %722 = vst [vmem:[%s218 + $0x18] sm:$0xf] %v658
        %723 = vst [vmem:[%s218 + $0x1c] sm:$0xf] %v659
        %724 = vst [vmem:[%s218 + $0x20] sm:$0xf] %v660
        %725 = vst [vmem:[%s218 + $0x24] sm:$0xf] %v661
        %726 = vst [vmem:[%s218 + $0x28] sm:$0xf] %v662
        %727 = vst [vmem:[%s218 + $0x2c] sm:$0xf] %v663
        %728 = vst [vmem:[%s218 + $0x30] sm:$0xf] %v664
        %729 = vst [vmem:[%s218 + $0x34] sm:$0xf] %v665
        %730 = vst [vmem:[%s218 + $0x38] sm:$0xf] %v666
        %731 = vst [vmem:[%s218 + $0x3c] sm:$0xf] %v667
        %732 = vst [vmem:[%s218 + $0x40] sm:$0xf] %v668
        %733 = vst [vmem:[%s218 + $0x44] sm:$0xf] %v669
        %734 = vst [vmem:[%s218 + $0x48] sm:$0xf] %v670
        %735 = vst [vmem:[%s218 + $0x4c] sm:$0xf] %v671
        %736 = vst [vmem:[%s218 + $0x50] sm:$0xf] %v672
        %737 = vst [vmem:[%s218 + $0x54] sm:$0xf] %v673
        %738 = vst [vmem:[%s218 + $0x58] sm:$0xf] %v674
        %739 = vst [vmem:[%s218 + $0x5c] sm:$0xf] %v675
        %740 = vst [vmem:[%s218 + $0x60] sm:$0xf] %v676
        %741 = vst [vmem:[%s218 + $0x64] sm:$0xf] %v677
        %742 = vst [vmem:[%s218 + $0x68] sm:$0xf] %v678
        %743 = vst [vmem:[%s218 + $0x6c] sm:$0xf] %v679
        %744 = vst [vmem:[%s218 + $0x70] sm:$0xf] %v680
        %745 = vst [vmem:[%s218 + $0x74] sm:$0xf] %v681
        %746 = vst [vmem:[%s218 + $0x78] sm:$0xf] %v682
        %747 = vst [vmem:[%s218 + $0x7c] sm:$0xf] %v683
        %v748 = vadd.f32 %v462, %v465
        %v749 = vadd.f32 %v748, %v470
        %v750 = vadd.f32 %v749, %v473
        %v751 = vadd.f32 %v750, %v478
        %v752 = vadd.f32 %v751, %v481
        %v753 = vadd.f32 %v752, %v486
        %v754 = vadd.f32 %v753, %v489
        %v755 = vadd.f32 %v754, %v494
        %v756 = vadd.f32 %v755, %v497
        %v757 = vadd.f32 %v756, %v502
        %v758 = vadd.f32 %v757, %v505
        %v759 = vadd.f32 %v758, %v510
        %v760 = vadd.f32 %v759, %v513
        %v761 = vadd.f32 %v760, %v518
        %v762 = vadd.f32 %v761, %v521
        %v763 = vadd.f32 %v762, %v526
        %v764 = vadd.f32 %v763, %v529
        %v765 = vadd.f32 %v764, %v534
        %v766 = vadd.f32 %v765, %v537
        %v767 = vadd.f32 %v766, %v542
        %v768 = vadd.f32 %v767, %v545
        %v769 = vadd.f32 %v768, %v550
        %v770 = vadd.f32 %v769, %v553
        %v771 = vadd.f32 %v770, %v558
        %v772 = vadd.f32 %v771, %v561
        %v773 = vadd.f32 %v772, %v566
        %v774 = vadd.f32 %v773, %v569
        %v775 = vadd.f32 %v774, %v574
        %v776 = vadd.f32 %v775, %v577
        %v777 = vadd.f32 %v776, %v582
        %v778 = vadd.f32 %v777, %v585
        %v779 = vrot.slane %v778, 4
        %v780 = vadd.f32 %v778, %v779
        %v781 = vrot.slane %v780, 2
        %v782 = vadd.f32 %v780, %v781
        %v783 = vrot.slane %v782, 1
        %v784 = vadd.f32 %v782, %v783
        %785 = vst [vmem:[%s225] sm:$0x1] %v784
        %v786 = vmul.f32 %v462, %v462
        %v787 = vmul.f32 %v465, %v465
        %v788 = vmul.f32 %v470, %v470
        %v789 = vmul.f32 %v473, %v473
        %v790 = vmul.f32 %v478, %v478
        %v791 = vmul.f32 %v481, %v481
        %v792 = vmul.f32 %v486, %v486
        %v793 = vmul.f32 %v489, %v489
        %v794 = vmul.f32 %v494, %v494
        %v795 = vmul.f32 %v497, %v497
        %v796 = vmul.f32 %v502, %v502
        %v797 = vmul.f32 %v505, %v505
        %v798 = vmul.f32 %v510, %v510
        %v799 = vmul.f32 %v513, %v513
        %v800 = vmul.f32 %v518, %v518
        %v801 = vmul.f32 %v521, %v521
        %v802 = vmul.f32 %v526, %v526
        %v803 = vmul.f32 %v529, %v529
        %v804 = vmul.f32 %v534, %v534
        %v805 = vmul.f32 %v537, %v537
        %v806 = vmul.f32 %v542, %v542
        %v807 = vmul.f32 %v545, %v545
        %v808 = vmul.f32 %v550, %v550
        %v809 = vmul.f32 %v553, %v553
        %v810 = vmul.f32 %v558, %v558
        %v811 = vmul.f32 %v561, %v561
        %v812 = vmul.f32 %v566, %v566
        %v813 = vmul.f32 %v569, %v569
        %v814 = vmul.f32 %v574, %v574
        %v815 = vmul.f32 %v577, %v577
        %v816 = vmul.f32 %v582, %v582
        %v817 = vmul.f32 %v585, %v585
        %v818 = vadd.f32 %v786, %v787
        %v819 = vadd.f32 %v818, %v788
        %v820 = vadd.f32 %v819, %v789
        %v821 = vadd.f32 %v820, %v790
        %v822 = vadd.f32 %v821, %v791
        %v823 = vadd.f32 %v822, %v792
        %v824 = vadd.f32 %v823, %v793
        %v825 = vadd.f32 %v824, %v794
        %v826 = vadd.f32 %v825, %v795
        %v827 = vadd.f32 %v826, %v796
        %v828 = vadd.f32 %v827, %v797
        %v829 = vadd.f32 %v828, %v798
        %v830 = vadd.f32 %v829, %v799
        %v831 = vadd.f32 %v830, %v800
        %v832 = vadd.f32 %v831, %v801
        %v833 = vadd.f32 %v832, %v802
        %v834 = vadd.f32 %v833, %v803
        %v835 = vadd.f32 %v834, %v804
        %v836 = vadd.f32 %v835, %v805
        %v837 = vadd.f32 %v836, %v806
        %v838 = vadd.f32 %v837, %v807
        %v839 = vadd.f32 %v838, %v808
        %v840 = vadd.f32 %v839, %v809
        %v841 = vadd.f32 %v840, %v810
        %v842 = vadd.f32 %v841, %v811
        %v843 = vadd.f32 %v842, %v812
        %v844 = vadd.f32 %v843, %v813
        %v845 = vadd.f32 %v844, %v814
        %v846 = vadd.f32 %v845, %v815
        %v847 = vadd.f32 %v846, %v816
        %v848 = vadd.f32 %v847, %v817
        %v849 = vrot.slane %v848, 4
        %v850 = vadd.f32 %v848, %v849
        %v851 = vrot.slane %v850, 2
        %v852 = vadd.f32 %v850, %v851
        %v853 = vrot.slane %v852, 1
        %v854 = vadd.f32 %v852, %v853
        %855 = vst [vmem:[%s225 + $0x1] sm:$0x1] %v854
        %s856 = sand.u32 %s106, 1
        %s857 = scalar_lea.sflag [#allocation3], %s856
        %s858 = sand.u32 %s106, 1
        %s859 = smul.addr %s858, 128
        %s860 = scalar_lea.vmem [#allocation2], %s859
        %s861 = sand.u32 %s136, 1
        %s862 = scalar_lea.sflag [#allocation5], %s861
        %s863 = sand.u32 %s136, 1
        %s864 = smul.addr %s863, 2
        %s865 = scalar_lea.vmem [#allocation4], %s864
        // Predicated region
        $region29: #{tpu_custom_call.1} parent=27 // pred_check
          %p866 = pneg %p116
        $region30: #{tpu_custom_call.1} parent=27 // pred_check_branch
          %868 = sbr.rel (%p866) target = $region32
        $region31: #{tpu_custom_call.1} parent=27 // pred_region
          %s869 = smul.u32 32, %s27
          %s871 = ssub.s32 2048, 2048
          %872 = vsyncadd %s857, %s871
          %s873 = sadd.s32 %s28, %s869
          %s874 = smul.addr %s26, 32
          %s875 = sadd.s32 %s873, %s874
          %s876 = smul.addr %s875, 64
          %s877 = scalar_lea.hbm %s2, %s876
          %s878 = sshll.u32 %s860, 4
          %s879 = int_to_ptr.vmem [resolvable:$true] %s878
          %884 = dma.vmem_to_hbm [thread:$0]  %s879, 2048, %s877, %s857, 64, 64, 4
        $region32: #{tpu_custom_call.1} parent=27 // pred_fallthru
          _
        // Predicated region
        $region33: #{tpu_custom_call.1} parent=27 // pred_check
          %p885 = pneg %p146
        $region34: #{tpu_custom_call.1} parent=27 // pred_check_branch
          %887 = sbr.rel (%p885) target = $region36
        $region35: #{tpu_custom_call.1} parent=27 // pred_region
          %s889 = ssub.s32 32, 32
          %890 = vsyncadd %s862, %s889
          %s891 = sadd.s32 %s28, %s27
          %s892 = sadd.s32 %s891, %s26
          %s893 = smul.addr %s892, 32
          %s894 = scalar_lea.hbm %s3, %s893
          %s896 = sshll.u32 %s865, 4
          %s897 = int_to_ptr.vmem [resolvable:$true] %s896
          %899 = dma.vmem_to_hbm [thread:$0]  %s897, 32, %s894, %s862
        $region36: #{tpu_custom_call.1} parent=27 // pred_fallthru
          _
      $region28: #{tpu_custom_call.1} parent=5 // pred_fallthru
        _
      %p900 = scmp.le.s32.totalorder 2, %s16
      // Predicated region
      $region37: #{tpu_custom_call.1} parent=5 // pred_check
        %p901 = pneg %p900
      $region38: #{tpu_custom_call.1} parent=5 // pred_check_branch
        %903 = sbr.rel (%p901) target = $region40
      $region39: #{tpu_custom_call.1} parent=5 // pred_region
        %s904 = ssub.s32 %s16, 2
        // Predicated region
        $region41: #{tpu_custom_call.1} parent=39 // pred_check
          %p905 = pneg %p122
        $region42: #{tpu_custom_call.1} parent=39 // pred_check_branch
          %907 = sbr.rel (%p905) target = $region44
        $region43: #{tpu_custom_call.1} parent=39 // pred_region
          %s908 = sand.u32 %s107, 1
          %s909 = scalar_lea.sflag [#allocation3], %s908
          %s910 = sand.u32 %s107, 1
          %s911 = smul.addr %s910, 128
          %s912 = scalar_lea.vmem [#allocation2], %s911
          %913 = dma.done %s909, 2048
        $region44: #{tpu_custom_call.1} parent=39 // pred_fallthru
          _
        // Predicated region
        $region45: #{tpu_custom_call.1} parent=39 // pred_check
          %p914 = pneg %p152
        $region46: #{tpu_custom_call.1} parent=39 // pred_check_branch
          %916 = sbr.rel (%p914) target = $region48
        $region47: #{tpu_custom_call.1} parent=39 // pred_region
          %s917 = sand.u32 %s137, 1
          %s918 = scalar_lea.sflag [#allocation5], %s917
          %s919 = sand.u32 %s137, 1
          %s920 = smul.addr %s919, 2
          %s921 = scalar_lea.vmem [#allocation4], %s920
          %922 = dma.done %s918, 32
        $region48: #{tpu_custom_call.1} parent=39 // pred_fallthru
          _
      $region40: #{tpu_custom_call.1} parent=5 // pred_fallthru
        _
    $region6: #{tpu_custom_call.1} parent=1 // loop_footer
      %s20 = sadd.s32 1, %s16
    $region7: #{tpu_custom_call.1} parent=1 // loop_footer_branch
      %15 = sbr.rel target = $region3
    $region8: #{tpu_custom_call.1} parent=1 // loop_exit
      _
    %923 = vsyncpa [#allocation3], 1
    %s924 = scalar_lea.sflag [#allocation3], 1
    %925 = vsyncpa %s924, 1
    %926 = vsyncpa [#allocation5], 1
    %s927 = scalar_lea.sflag [#allocation5], 1
    %928 = vsyncpa %s927, 1

</llo_original>
